<compile_context>
chip_gen: v6e
topology: v6e:2x2x1
jax: 0.10.0
libtpu: 0.0.40
codegen_flags: <defaults>
</compile_context>

<pallas_src>
import functools

import jax
import jax.numpy as jnp
from jax.experimental import pallas as pl
from jax.experimental.pallas import tpu as pltpu

T_TEMP = 2.0                 # distillation temperature (kd_kl_loss default T=2)
INV_T = 1.0 / T_TEMP


# ----------------------------------------------------------------------------
# In-kernel math helpers (pure VPU/EUP; nothing here wants the MXU)
# ----------------------------------------------------------------------------
def _student_stats(s):
    """Shifted student logits/T and their exp-sum.  s: (TB, C) f32."""
    z = s * INV_T
    zs = z - jnp.max(z, axis=-1, keepdims=True)
    sum_s = jnp.sum(jnp.exp(zs), axis=-1, keepdims=True)          # (TB, 1)
    return zs, sum_s


def _teacher_stats(t):
    """Shifted teacher logits/T, exp, exp-sum.  t: (TB, C) f32."""
    z = t * INV_T
    zt = z - jnp.max(z, axis=-1, keepdims=True)
    e_t = jnp.exp(zt)
    sum_t = jnp.sum(e_t, axis=-1, keepdims=True)                  # (TB, 1)
    return zt, e_t, sum_t


def _kd_rows(zs, sum_s, zt, e_t, sum_t):
    """Per-row sum_j pt*(log_pt - log_ps), simplified to

        sum_j e_t*(zt - zs) / sum_t  +  log(sum_s / sum_t)

    so no (TB, C) probability / log-probability arrays are materialized."""
    dot_ts = jnp.sum(e_t * (zt - zs), axis=-1, keepdims=True)     # (TB, 1)
    inv_sum_t = pl.reciprocal(sum_t, approx=False)                # (TB, 1)
    return dot_ts * inv_sum_t + jnp.log(sum_s * inv_sum_t)        # (TB, 1)


# ----------------------------------------------------------------------------
# Kernels — each emits only partial KL sums; the tiny MLP lives in the wrapper
# ----------------------------------------------------------------------------
def _kd_kernel_nobias(s_ref, t_ref, out_ref):
    """Default path (cls_num_list=None): one KD pass, balanced_loss == loss.
    out block (1,1,1) is resident across the 'arbitrary' axis per split."""
    i = pl.program_id(1)

    @pl.when(i == 0)
    def _():
        out_ref[...] = jnp.zeros_like(out_ref)

    s = s_ref[...].astype(jnp.float32)
    t = t_ref[...].astype(jnp.float32)
    zs, sum_s = _student_stats(s)
    zt, e_t, sum_t = _teacher_stats(t)
    per_row = _kd_rows(zs, sum_s, zt, e_t, sum_t)                 # (TB, 1)
    out_ref[...] += jnp.sum(per_row, axis=0, keepdims=True).reshape(1, 1, 1)


def _kd_kernel_bias(s_ref, t_ref, bs_ref, *rest, teacher_biased, tb,
                    tiles_per_split, b_actual, needs_mask):
    """Class-prior-bias path.  When option=='student' the teacher distribution
    is unchanged, so its stats are computed once and reused (bias_t not even
    passed in).  out block (1,1,2): [unbiased partial, biased partial]."""
    if teacher_biased:
        bt_ref, out_ref = rest
    else:
        (out_ref,) = rest

    c = pl.program_id(0)
    i = pl.program_id(1)

    @pl.when(i == 0)
    def _():
        out_ref[...] = jnp.zeros_like(out_ref)

    s = s_ref[...].astype(jnp.float32)
    t = t_ref[...].astype(jnp.float32)

    zs, sum_s = _student_stats(s)
    zt, e_t, sum_t = _teacher_stats(t)
    per_row = _kd_rows(zs, sum_s, zt, e_t, sum_t)                 # (TB, 1)

    # Bias is added to the logits *before* the /T (matches torch, which biases
    # o_student / o_teacher and then calls softmax(x / T)).
    zs_b, sum_s_b = _student_stats(s + bs_ref[...].astype(jnp.float32))
    if teacher_biased:
        zt_b, e_t_b, sum_t_b = _teacher_stats(t + bt_ref[...].astype(jnp.float32))
    else:
        zt_b, e_t_b, sum_t_b = zt, e_t, sum_t                     # reuse stats
    per_row_b = _kd_rows(zs_b, sum_s_b, zt_b, e_t_b, sum_t_b)     # (TB, 1)

    if needs_mask:
        # Zero-padded rows can contribute nonzero KL when bias_s != bias_t.
        rows = (jax.lax.broadcasted_iota(jnp.int32, per_row.shape, 0)
                + (c * tiles_per_split + i) * tb)
        valid = (rows < b_actual).astype(jnp.float32)
        per_row = per_row * valid
        per_row_b = per_row_b * valid

    p0 = jnp.sum(per_row, axis=0, keepdims=True)                  # (1, 1)
    p1 = jnp.sum(per_row_b, axis=0, keepdims=True)                # (1, 1)
    out_ref[...] += jnp.concatenate([p0, p1], axis=-1).reshape(1, 1, 2)


# ----------------------------------------------------------------------------
# Tile / VMEM sizing
# ----------------------------------------------------------------------------
def _hw_budgets():
    """(vmem_limit_bytes, per-input block byte target), sized per generation.

    Budget: 2 inputs x 2 pipeline buffers x block plus the f32 elementwise
    temporaries must fit under the scoped limit, so blocks ~= limit / 10.
      v5e/v6e (128 MiB phys) -> ~96 MiB limit, ~9.6 MiB blocks
      v7x      (64 MiB phys) -> ~48 MiB limit, ~4.8 MiB blocks
    """
    phys = 64 << 20                               # conservative fallback
    try:
        info = pltpu.get_tpu_info()
        phys = int(getattr(info, "vmem_capacity_bytes", phys)) or phys
    except Exception:
        pass
    vmem_limit = (phys * 3) // 4
    block_bytes = max(2 << 20, vmem_limit // 10)
    return vmem_limit, block_bytes


def _pick_batch_tile(B, C, itemsize, block_bytes):
    row_bytes = max(1, C * itemsize)
    tb = block_bytes // row_bytes
    if tb >= B:
        return B                                  # single block == full batch
    return max(8, (tb // 8) * 8)                  # sublane multiple when < B


# ----------------------------------------------------------------------------
# Wrapper
# ----------------------------------------------------------------------------
def macro_attention_factor_relu(logits, teacher_logits, params,
                                cls_num_list=None, option="student", gamma=1.0,
                                batch_tile=None):
    """Returns (total_loss scalar, factors (2,)) matching the torch forward.
    logits / teacher_logits may be f32 or bf16 (upcast happens in-kernel)."""
    B, C = logits.shape
    inv_n = 1.0 / float(B * C)
    with_bias = cls_num_list is not None
    teacher_biased = with_bias and (option == "teacher_student")

    itemsize = jnp.dtype(logits.dtype).itemsize
    vmem_limit, block_bytes = _hw_budgets()

    if batch_tile is not None:
        tb = int(batch_tile)
        tb = B if tb >= B else max(8, (tb // 8) * 8)   # keep (8,128) legal
    else:
        tb = _pick_batch_tile(B, C, itemsize, block_bytes)

    num_tiles = pl.cdiv(B, tb)
    n_splits = 2 if num_tiles >= 2 else 1         # 2 TCs on v7x; serial elsewhere
    tiles_per_split = pl.cdiv(num_tiles, n_splits)
    bp = n_splits * tiles_per_split * tb
    needs_mask = bp != B
    if needs_mask:
        # Zero rows contribute exactly 0 to the unbiased KD sum; the biased
        # kernel masks padded rows explicitly.  The 'mean' divisor stays B*C.
        pad = ((0, bp - B), (0, 0))
        logits = jnp.pad(logits, pad)
        teacher_logits = jnp.pad(teacher_logits, pad)

    grid = (n_splits, tiles_per_split)
    s_spec = pl.BlockSpec((tb, C), lambda c, i: (c * tiles_per_split + i, 0))
    row_spec = pl.BlockSpec((1, C), lambda c, i: (0, 0))
    cparams = pltpu.CompilerParams(
        dimension_semantics=("parallel", "arbitrary"),
        vmem_limit_bytes=vmem_limit)

    if not with_bias:
        cost = pl.CostEstimate(flops=15 * B * C,
                               transcendentals=2 * B * C + 2 * B,
                               bytes_accessed=2 * B * C * itemsize)
        partials = pl.pallas_call(
            _kd_kernel_nobias,
            grid=grid,
            out_shape=jax.ShapeDtypeStruct((n_splits, 1, 1), jnp.float32),
            in_specs=[s_spec, s_spec],
            out_specs=pl.BlockSpec((1, 1, 1), lambda c, i: (c, 0, 0)),
            compiler_params=cparams,
            cost_estimate=cost,
        )(logits, teacher_logits)
        loss = jnp.sum(partials) * inv_n
        bal = loss                                 # no second KD pass
    else:
        w = jnp.asarray(cls_num_list, jnp.float32).reshape(1, C)
        w = w / jnp.sum(w)
        bias = (jnp.log(w + 1e-9) * gamma).astype(jnp.float32)

        kernel = functools.partial(
            _kd_kernel_bias, teacher_biased=teacher_biased, tb=tb,
            tiles_per_split=tiles_per_split, b_actual=B, needs_mask=needs_mask)

        inputs = [logits, teacher_logits, bias]
        in_specs = [s_spec, s_spec, row_spec]
        if teacher_biased:
            inputs.append(bias)
            in_specs.append(row_spec)

        n_trans = (4 if teacher_biased else 3) * B * C + 4 * B
        cost = pl.CostEstimate(flops=30 * B * C,
                               transcendentals=n_trans,
                               bytes_accessed=2 * B * C * itemsize)
        partials = pl.pallas_call(
            kernel,
            grid=grid,
            out_shape=jax.ShapeDtypeStruct((n_splits, 1, 2), jnp.float32),
            in_specs=in_specs,
            out_specs=pl.BlockSpec((1, 1, 2), lambda c, i: (c, 0, 0)),
            compiler_params=cparams,
            cost_estimate=cost,
        )(*inputs)
        loss = jnp.sum(partials[:, 0, 0]) * inv_n
        bal = jnp.sum(partials[:, 0, 1]) * inv_n

    # Tiny 2-8-2 loss balancer + softmax + weighted total (hoisted out of the
    # kernel; ~20 scalar flops, lets each TensorCore emit only a partial sum).
    inp = jnp.stack([loss, bal])                                  # (2,)
    h = jnp.maximum(inp @ params["w1"] + params["b1"][0], 0.0)    # (8,)
    o = params["w2t"] @ h + params["b2"][0]                       # (2,)
    factors = jax.nn.softmax(o, axis=0)
    total = factors[0] * loss + factors[1] * bal
    return total, factors


# ----------------------------------------------------------------------------
# Params / reference / test
# ----------------------------------------------------------------------------
def init_params(key):
    # torch nn.Linear default init: U(-1/sqrt(fan_in), 1/sqrt(fan_in)).
    k1, k2, k3, k4 = jax.random.split(key, 4)
    lim1 = 1.0 / jnp.sqrt(2.0)   # Linear(2, 8)
    lim2 = 1.0 / jnp.sqrt(8.0)   # Linear(8, 2)
    return {
        "w1": jax.random.uniform(k1, (2, 8), jnp.float32, -lim1, lim1),   # = torch W1.T
        "b1": jax.random.uniform(k2, (1, 8), jnp.float32, -lim1, lim1),
        "w2t": jax.random.uniform(k3, (2, 8), jnp.float32, -lim2, lim2),  # = torch W2
        "b2": jax.random.uniform(k4, (1, 2), jnp.float32, -lim2, lim2),
    }


def _reference(logits, teacher, params, cls_num_list=None, option="student",
               gamma=1.0):
    # pure-JAX mirror of the torch forward (f32 compute)
    logits = logits.astype(jnp.float32)
    teacher = teacher.astype(jnp.float32)

    def kd(s, t):
        lps = jax.nn.log_softmax(s / T_TEMP, axis=1)
        lpt = jax.nn.log_softmax(t / T_TEMP, axis=1)
        pt = jnp.exp(lpt)
        return jnp.mean(pt * (lpt - lps))

    loss = kd(logits, teacher)
    if cls_num_list is not None:
        w = jnp.asarray(cls_num_list, jnp.float32).reshape(1, -1)
        w = w / jnp.sum(w)
        bias = jnp.log(w + 1e-9) * gamma
        s_b = logits + bias
        t_b = teacher + bias if option == "teacher_student" else teacher
        bal = kd(s_b, t_b)
    else:
        bal = loss
    inp = jnp.stack([loss, bal])                                  # (2,)
    h = jnp.maximum(inp @ params["w1"] + params["b1"][0], 0.0)    # (8,)
    o = params["w2t"] @ h + params["b2"][0]                       # (2,)
    f = jax.nn.softmax(o, axis=0)
    return f[0] * loss + f[1] * bal, f


if __name__ == "__main__":
    key = jax.random.PRNGKey(0)
    kp, k1, k2, k3, k4, k5, k6 = jax.random.split(key, 7)
    params = init_params(kp)

    # 1) default path (cls_num_list=None), single tile ----------------------
    B, C = 8, 16
    x = jax.random.normal(k1, (B, C), jnp.float32)
    t = jax.random.normal(k2, (B, C), jnp.float32)
    total, factors = macro_attention_factor_relu(x, t, params)
    jax.block_until_ready((total, factors))
    rt, rf = _reference(x, t, params)
    assert jnp.allclose(total, rt, atol=1e-5), (total, rt)
    assert jnp.allclose(factors, rf, atol=1e-5), (factors, rf)

    # 2) class-prior bias (teacher_student): multi-tile, 2-way split,
    #    padding 20 -> 32 rows with masking --------------------------------
    B2, C2 = 20, 16
    x2 = jax.random.normal(k3, (B2, C2), jnp.float32)
    t2 = jax.random.normal(k4, (B2, C2), jnp.float32)
    cls = [float(i + 1) for i in range(C2)]
    total2, factors2 = macro_attention_factor_relu(
        x2, t2, params, cls_num_list=cls, option="teacher_student",
        gamma=1.0, batch_tile=8)
    jax.block_until_ready((total2, factors2))
    rt2, rf2 = _reference(x2, t2, params, cls_num_list=cls,
                          option="teacher_student", gamma=1.0)
    assert jnp.allclose(total2, rt2, atol=1e-5), (total2, rt2)
    assert jnp.allclose(factors2, rf2, atol=1e-5), (factors2, rf2)

    # 3) class-prior bias, option='student' (teacher-stat reuse), bf16 inputs
    B3, C3 = 16, 16
    x3 = jax.random.normal(k5, (B3, C3), jnp.float32).astype(jnp.bfloat16)
    t3 = jax.random.normal(k6, (B3, C3), jnp.float32).astype(jnp.bfloat16)
    total3, factors3 = macro_attention_factor_relu(
        x3, t3, params, cls_num_list=cls, option="student",
        gamma=1.0, batch_tile=8)
    jax.block_until_ready((total3, factors3))
    rt3, rf3 = _reference(x3, t3, params, cls_num_list=cls,
                          option="student", gamma=1.0)
    assert jnp.allclose(total3, rt3, atol=1e-4), (total3, rt3)
    assert jnp.allclose(factors3, rf3, atol=1e-4), (factors3, rf3)

    print("KERNEL_OK")
</pallas_src>

<mosaic_0001>
module attributes {stable_mosaic.version = 11 : i64} {
  func.func @_kd_kernel_nobias(%arg0: i32, %arg1: i32, %arg2: memref<8x16xf32, #tpu.memory_space<vmem>>, %arg3: memref<8x16xf32, #tpu.memory_space<vmem>>, %arg4: memref<1x1x1xf32, #tpu.memory_space<vmem>>) attributes {dimension_semantics = [#tpu.dimension_semantics<parallel>, #tpu.dimension_semantics<arbitrary>], iteration_bounds = array<i64: 1, 1>, scalar_prefetch = 0 : i64, scratch_operands = 0 : i64, tpu.core_type = #tpu.core_type<tc>, window_params = [{transform_indices = @transform_0, window_bounds = array<i64: 8, 16>}, {transform_indices = @transform_1, window_bounds = array<i64: 8, 16>}, {transform_indices = @transform_2, window_bounds = array<i64: 1, 1, 1>}]} {
    %c0_i32 = arith.constant 0 : i32
    %0 = arith.cmpi eq, %arg1, %c0_i32 : i32
    %1 = arith.extui %0 : i1 to i32
    %c0_i32_0 = arith.constant 0 : i32
    %2 = arith.cmpi ne, %1, %c0_i32_0 : i32
    scf.if %2 {
      %cst_17 = arith.constant 0.000000e+00 : f32
      %38 = vector.broadcast %cst_17 : f32 to vector<1x1x1xf32>
      %c0_18 = arith.constant 0 : index
      %c0_19 = arith.constant 0 : index
      %c0_20 = arith.constant 0 : index
      %39 = vector.load %arg4[%c0_18, %c0_19, %c0_20] : memref<1x1x1xf32, #tpu.memory_space<vmem>>, vector<1x1x1xf32>
      tpu.vector_store %arg4[%c0_18, %c0_19, %c0_20], %38 {strides = array<i32>} : memref<1x1x1xf32, #tpu.memory_space<vmem>>, vector<1x1x1xf32>,
    } else {
    }
    %c0 = arith.constant 0 : index
    %c0_1 = arith.constant 0 : index
    %3 = vector.load %arg2[%c0, %c0_1] : memref<8x16xf32, #tpu.memory_space<vmem>>, vector<8x16xf32>
    %c0_2 = arith.constant 0 : index
    %c0_3 = arith.constant 0 : index
    %4 = vector.load %arg3[%c0_2, %c0_3] : memref<8x16xf32, #tpu.memory_space<vmem>>, vector<8x16xf32>
    %cst = arith.constant 5.000000e-01 : f32
    %5 = vector.broadcast %cst : f32 to vector<8x16xf32>
    %6 = arith.mulf %3, %5 : vector<8x16xf32>
    %cst_4 = arith.constant dense<0xFF800000> : vector<8xf32>
    %7 = vector.multi_reduction <maximumf>, %6, %cst_4 [1] : vector<8x16xf32> to vector<8xf32>
    %8 = vector.shape_cast %7 : vector<8xf32> to vector<8x1xf32>
    %9 = vector.broadcast %8 : vector<8x1xf32> to vector<8x16xf32>
    %10 = arith.subf %6, %9 : vector<8x16xf32>
    %11 = math.exp %10 : vector<8x16xf32>
    %cst_5 = arith.constant dense<0.000000e+00> : vector<8xf32>
    %12 = vector.multi_reduction <add>, %11, %cst_5 [1] : vector<8x16xf32> to vector<8xf32>
    %13 = vector.shape_cast %12 : vector<8xf32> to vector<8x1xf32>
    %cst_6 = arith.constant 5.000000e-01 : f32
    %14 = vector.broadcast %cst_6 : f32 to vector<8x16xf32>
    %15 = arith.mulf %4, %14 : vector<8x16xf32>
    %cst_7 = arith.constant dense<0xFF800000> : vector<8xf32>
    %16 = vector.multi_reduction <maximumf>, %15, %cst_7 [1] : vector<8x16xf32> to vector<8xf32>
    %17 = vector.shape_cast %16 : vector<8xf32> to vector<8x1xf32>
    %18 = vector.broadcast %17 : vector<8x1xf32> to vector<8x16xf32>
    %19 = arith.subf %15, %18 : vector<8x16xf32>
    %20 = math.exp %19 : vector<8x16xf32>
    %cst_8 = arith.constant dense<0.000000e+00> : vector<8xf32>
    %21 = vector.multi_reduction <add>, %20, %cst_8 [1] : vector<8x16xf32> to vector<8xf32>
    %22 = vector.shape_cast %21 : vector<8xf32> to vector<8x1xf32>
    %23 = arith.subf %19, %10 : vector<8x16xf32>
    %24 = arith.mulf %20, %23 : vector<8x16xf32>
    %cst_9 = arith.constant dense<0.000000e+00> : vector<8xf32>
    %25 = vector.multi_reduction <add>, %24, %cst_9 [1] : vector<8x16xf32> to vector<8xf32>
    %26 = vector.shape_cast %25 : vector<8xf32> to vector<8x1xf32>
    %27 = tpu.reciprocal %22 : vector<8x1xf32> -> vector<8x1xf32>
    %28 = arith.mulf %26, %27 : vector<8x1xf32>
    %29 = arith.mulf %13, %27 : vector<8x1xf32>
    %30 = math.log %29 : vector<8x1xf32>
    %31 = arith.addf %28, %30 : vector<8x1xf32>
    %c0_10 = arith.constant 0 : index
    %c0_11 = arith.constant 0 : index
    %c0_12 = arith.constant 0 : index
    %32 = vector.load %arg4[%c0_10, %c0_11, %c0_12] : memref<1x1x1xf32, #tpu.memory_space<vmem>>, vector<1x1x1xf32>
    %cst_13 = arith.constant dense<0.000000e+00> : vector<1xf32>
    %33 = vector.multi_reduction <add>, %31, %cst_13 [0] : vector<8x1xf32> to vector<1xf32>
    %34 = vector.shape_cast %33 : vector<1xf32> to vector<1x1xf32>
    %35 = vector.shape_cast %34 : vector<1x1xf32> to vector<1x1x1xf32>
    %36 = arith.addf %32, %35 : vector<1x1x1xf32>
    %c0_14 = arith.constant 0 : index
    %c0_15 = arith.constant 0 : index
    %c0_16 = arith.constant 0 : index
    %37 = vector.load %arg4[%c0_14, %c0_15, %c0_16] : memref<1x1x1xf32, #tpu.memory_space<vmem>>, vector<1x1x1xf32>
    tpu.vector_store %arg4[%c0_14, %c0_15, %c0_16], %36 {strides = array<i32>} : memref<1x1x1xf32, #tpu.memory_space<vmem>>, vector<1x1x1xf32>,
    return
  }
  func.func @transform_0(%arg0: i32, %arg1: i32) -> (i32, i32) {
    %c1_i32 = arith.constant 1 : i32
    %0 = arith.muli %arg0, %c1_i32 : i32
    %1 = arith.addi %0, %arg1 : i32
    %c0_i32 = arith.constant 0 : i32
    %c0_i32_0 = arith.constant 0 : i32
    return %1, %c0_i32 : i32, i32
  }
  func.func @transform_1(%arg0: i32, %arg1: i32) -> (i32, i32) {
    %c1_i32 = arith.constant 1 : i32
    %0 = arith.muli %arg0, %c1_i32 : i32
    %1 = arith.addi %0, %arg1 : i32
    %c0_i32 = arith.constant 0 : i32
    %c0_i32_0 = arith.constant 0 : i32
    return %1, %c0_i32 : i32, i32
  }
  func.func @transform_2(%arg0: i32, %arg1: i32) -> (i32, i32, i32) {
    %c0_i32 = arith.constant 0 : i32
    %c0_i32_0 = arith.constant 0 : i32
    %c0_i32_1 = arith.constant 0 : i32
    return %arg0, %c0_i32, %c0_i32_0 : i32, i32, i32
  }
}

</mosaic_0001>

<llo_original>
// kernel: tpu_custom_call.1
$region0: #{tpu_custom_call.1}
  #allocation0 [shape = 'u32[]', space=smem, size = 0x4, offset = 0x4, fixed_abs, tag = 'smem constant byte address 0x4 - core index']
  #allocation1 [shape = 'u32[144,128]{1,0:T(1,128)}', space=vmem, size = 0x12000, scoped, tag = 'internal scratch']
  %s0 = inlined_call_operand.hbm [shape: f32[8,16], index: 0, kind: input, shape index: {}]
  %s1 = inlined_call_operand.hbm [shape: f32[8,16], index: 1, kind: input, shape index: {}]
  %s2 = inlined_call_operand.hbm [shape: f32[1,1,1], index: 2, kind: output, shape index: {}]
  %s3 = sld [smem:[#allocation0]]
  $region30: #{tpu_custom_call.1} parent=0
    _
  %s5 = ssub.s32 1, %s3
  %s6 = scalar_select 0, %s5, %s3
  $region1: #{tpu_custom_call.1} parent=0
    #allocation2 [shape = 'u8[4096]{0}', space=vmem, size = 0x1000, scoped, tag = 'input window, operand 0, single buffered']
    #allocation3 [shape = 's32[1]{0}', space=sflag, size = 0x4, scoped, tag = 'scoped memory for tpu_custom_call.1']
    #allocation4 [shape = 's32[1]{0}', space=sflag, size = 0x4, scoped, tag = 'scoped memory for tpu_custom_call.1']
    #allocation5 [shape = 'u8[4096]{0}', space=vmem, size = 0x1000, scoped, tag = 'input window, operand 1, single buffered']
    #allocation6 [shape = 's32[1]{0}', space=sflag, size = 0x4, scoped, tag = 'scoped memory for tpu_custom_call.1']
    #allocation7 [shape = 'u8[512]{0}', space=vmem, size = 0x400, scoped, tag = 'output window, operand 0, single buffered']
    %7 = vsyncpa [#allocation3], 0
    %8 = vsyncpa [#allocation6], 0
    %9 = vsyncpa [#allocation4], 0
    // Predicated region
    $region2: #{tpu_custom_call.1} parent=1 // pred_check
      _
    $region3: #{tpu_custom_call.1} parent=1 // pred_check_branch
      %11 = sbr.rel (0) target = $region5
    $region4: #{tpu_custom_call.1} parent=1 // pred_region
      %s12 = sadd.s32 0, 0
      %s14 = ssub.s32 128, 128
      %15 = vsyncadd [#allocation3], %s14
      %s16 = smul.addr %s12, 128
      %s17 = scalar_lea.hbm %s0, %s16
      %s19 = sshll.u32 [#allocation2], 4
      %s20 = int_to_ptr.vmem [resolvable:$true] %s19
      %22 = dma.hbm_to_vmem [thread:$0]  %s17, 128, %s20, [#allocation3]
    $region5: #{tpu_custom_call.1} parent=1 // pred_fallthru
      _
    // Predicated region
    $region6: #{tpu_custom_call.1} parent=1 // pred_check
      _
    $region7: #{tpu_custom_call.1} parent=1 // pred_check_branch
      %24 = sbr.rel (0) target = $region9
    $region8: #{tpu_custom_call.1} parent=1 // pred_region
      %s25 = sadd.s32 0, 0
      %s27 = ssub.s32 128, 128
      %28 = vsyncadd [#allocation6], %s27
      %s29 = smul.addr %s25, 128
      %s30 = scalar_lea.hbm %s1, %s29
      %s32 = sshll.u32 [#allocation5], 4
      %s33 = int_to_ptr.vmem [resolvable:$true] %s32
      %35 = dma.hbm_to_vmem [thread:$0]  %s30, 128, %s33, [#allocation6]
    $region9: #{tpu_custom_call.1} parent=1 // pred_fallthru
      _
    // Predicated region
    $region10: #{tpu_custom_call.1} parent=1 // pred_check
      _
    $region11: #{tpu_custom_call.1} parent=1 // pred_check_branch
      %37 = sbr.rel (0) target = $region13
    $region12: #{tpu_custom_call.1} parent=1 // pred_region
      %38 = dma.done [#allocation3], 128
    $region13: #{tpu_custom_call.1} parent=1 // pred_fallthru
      _
    // Predicated region
    $region14: #{tpu_custom_call.1} parent=1 // pred_check
      _
    $region15: #{tpu_custom_call.1} parent=1 // pred_check_branch
      %40 = sbr.rel (0) target = $region17
    $region16: #{tpu_custom_call.1} parent=1 // pred_region
      %41 = dma.done [#allocation6], 128
    $region17: #{tpu_custom_call.1} parent=1 // pred_fallthru
      _
    %s42 = sadd.s32 0, 0
    %s43 = sadd.s32 0, 0
    %p44 = scmp.eq.s32.totalorder 0, 0
    // Predicated region
    $region18: #{tpu_custom_call.1} parent=1 // pred_check
      %p45 = pneg %p44
    $region19: #{tpu_custom_call.1} parent=1 // pred_check_branch
      %47 = sbr.rel (%p45) target = $region21
    $region20: #{tpu_custom_call.1} parent=1 // pred_region
      %vm48 = vcmask 0
      %49 = vst.msk [vmem:[#allocation7] sm:$0x1] %vm48, 0.0
    $region21: #{tpu_custom_call.1} parent=1 // pred_fallthru
      _
    %v50 = vld [vmem:[#allocation2] sm:$0xff]
    %v51 = vld [vmem:[#allocation5] sm:$0xff]
    %v52 = vmul.f32 %v50, 0.5
    %vm53 = vcmask 130048
    %v54 = vsel %vm53, %v52, -inf
    %55 = vmax.xlane.f32.xlu0 %v54
    %v56 = vpop.xlane.xlu0 %55
    %v57 = vsub.f32 %v52, %v56
    %v58 = vmul.f32 %v57, 1.442695
    %v59 = vpow.pop %v58
    %v60 = vsel %vm53, %v59, 0.0
    %61 = vadd.xlane.f32.xlu0 %v60
    %v62 = vpop.xlane.xlu0 %61
    %v63 = vmul.f32 %v51, 0.5
    %v64 = vsel %vm53, %v63, -inf
    %65 = vmax.xlane.f32.xlu0 %v64
    %v66 = vpop.xlane.xlu0 %65
    %v67 = vsub.f32 %v63, %v66
    %v68 = vmul.f32 %v67, 1.442695
    %v69 = vpow.pop %v68
    %v70 = vsel %vm53, %v69, 0.0
    %71 = vadd.xlane.f32.xlu0 %v70
    %v72 = vpop.xlane.xlu0 %71
    %v73 = vsub.f32 %v67, %v57
    %v74 = vmul.f32 %v69, %v73
    %v75 = vsel %vm53, %v74, 0.0
    %76 = vadd.xlane.f32.xlu0 %v75
    %v77 = vpop.xlane.xlu0 %76
    %v78 = vrcp.pop %v72
    %v79 = vmul.f32 %v77, %v78
    %v80 = vmul.f32 %v62, %v78
    %v81 = vlog2.pop %v80
    %v82 = vmul.f32 %v81, 0.6931472
    %v83 = vadd.f32 %v79, %v82
    %v84 = vld [vmem:[#allocation7] sm:$0x1]
    %v85 = vrot.slane %v83, 4
    %v86 = vadd.f32 %v83, %v85
    %v87 = vrot.slane %v86, 2
    %v88 = vadd.f32 %v86, %v87
    %v89 = vrot.slane %v88, 1
    %v90 = vadd.f32 %v88, %v89
    %v91 = vadd.f32 %v84, %v90
    %vm92 = vcmask 0
    %93 = vst.msk [vmem:[#allocation7] sm:$0x1] %vm92, %v91
    // Predicated region
    $region22: #{tpu_custom_call.1} parent=1 // pred_check
      _
    $region23: #{tpu_custom_call.1} parent=1 // pred_check_branch
      %95 = sbr.rel (0) target = $region25
    $region24: #{tpu_custom_call.1} parent=1 // pred_region
      %s97 = ssub.s32 16, 16
      %98 = vsyncadd [#allocation4], %s97
      %s100 = sshll.u32 [#allocation7], 4
      %s101 = int_to_ptr.vmem [resolvable:$true] %s100
      %103 = dma.vmem_to_hbm [thread:$0]  %s101, 16, %s2, [#allocation4]
    $region25: #{tpu_custom_call.1} parent=1 // pred_fallthru
      _
    // Predicated region
    $region26: #{tpu_custom_call.1} parent=1 // pred_check
      _
    $region27: #{tpu_custom_call.1} parent=1 // pred_check_branch
      %105 = sbr.rel (0) target = $region29
    $region28: #{tpu_custom_call.1} parent=1 // pred_region
      %106 = dma.done [#allocation4], 16
    $region29: #{tpu_custom_call.1} parent=1 // pred_fallthru
      _
    %107 = vsyncpa [#allocation3], 1
    %108 = vsyncpa [#allocation6], 1
    %109 = vsyncpa [#allocation4], 1

</llo_original>
